<compile_context>
chip_gen: v6e
topology: v6e:2x2x1
jax: 0.10.0
libtpu: 0.0.40
codegen_flags: <defaults>
</compile_context>

<pallas_src>
import functools
import math

import jax
import jax.numpy as jnp
from jax import lax
from jax.experimental import pallas as pl
from jax.experimental.pallas import tpu as pltpu


# ---------------------------------------------------------------------------
# Pass 1: LayerNorm + fused Q/K/V projection (head-major bf16 outputs).
# ---------------------------------------------------------------------------
def _ln_qkv_kernel(x_ref, gamma_ref, beta_ref,
                   wq_ref, bq_ref, wk_ref, bk_ref, wv_ref, bv_ref,
                   q_ref, k_ref, v_ref,
                   *, num_heads, head_dim, scale, eps):
    x = x_ref[0]                                               # [T, H] f32
    mean = jnp.mean(x, axis=-1, keepdims=True)
    var = jnp.mean((x - mean) ** 2, axis=-1, keepdims=True)
    xn = (x - mean) * lax.rsqrt(var + eps)
    xn = xn * gamma_ref[0] + beta_ref[0]
    xn_b = xn.astype(jnp.bfloat16)                             # bf16 MXU inputs

    q = jnp.dot(xn_b, wq_ref[...], preferred_element_type=jnp.float32) + bq_ref[0]
    k = jnp.dot(xn_b, wk_ref[...], preferred_element_type=jnp.float32) + bk_ref[0]
    v = jnp.dot(xn_b, wv_ref[...], preferred_element_type=jnp.float32) + bv_ref[0]
    q = q * scale                                              # fold attn scale into Q once

    def to_head_major(y):                                      # [T, H] -> [nh, T, hd]
        parts = [y[:, h * head_dim:(h + 1) * head_dim] for h in range(num_heads)]
        return jnp.stack(parts, axis=0).astype(jnp.bfloat16)

    q_ref[0] = to_head_major(q)
    k_ref[0] = to_head_major(k)
    v_ref[0] = to_head_major(v)


# ---------------------------------------------------------------------------
# Pass 2: banded neighborhood attention + output projection + residual.
# ---------------------------------------------------------------------------
def _window_attn_kernel(x_ref, q_ref, *args,
                        num_heads, seq_tile, n_side, nq, half_win, dilation):
    n_slabs = 2 * n_side + 1
    k_refs = args[:n_slabs]
    v_refs = args[n_slabs:2 * n_slabs]
    wo_ref = args[2 * n_slabs]
    bo_ref = args[2 * n_slabs + 1]
    o_ref = args[2 * n_slabs + 2]

    T = seq_tile
    qi = pl.program_id(1)

    q = q_ref[0]                                               # [nh, T, hd] bf16

    # Band mask built per K/V slab from absolute positions (additive bias form).
    q_pos = qi * T + lax.broadcasted_iota(jnp.int32, (T, T), 0)
    k_local = lax.broadcasted_iota(jnp.int32, (T, T), 1)

    k_slabs, v_slabs, biases = [], [], []
    for s, d in enumerate(range(-n_side, n_side + 1)):
        idx = qi + d
        cd = jnp.clip(idx, 0, nq - 1)                          # clamped slab block index
        rel = (cd * T + k_local) - q_pos
        m = (rel >= -half_win) & (rel <= half_win)
        if dilation > 1:
            m = m & ((rel % dilation) == 0)
        if d != 0:                                             # drop duplicated (clamped) halo slabs
            m = m & ((idx >= 0) & (idx <= nq - 1))
        biases.append(jnp.where(m, 0.0, -jnp.inf).astype(jnp.float32))
        k_slabs.append(k_refs[s][0])
        v_slabs.append(v_refs[s][0])

    if n_slabs > 1:
        k_win = jnp.concatenate(k_slabs, axis=1)               # [nh, W, hd]
        v_win = jnp.concatenate(v_slabs, axis=1)
        bias = jnp.concatenate(biases, axis=1)                 # [T, W]
    else:
        k_win, v_win, bias = k_slabs[0], v_slabs[0], biases[0]

    # Scores for all heads in one batched MXU matmul: [nh, T, W].
    scores = lax.dot_general(q, k_win, (((2,), (2,)), ((0,), (0,))),
                             preferred_element_type=jnp.float32)
    scores = scores + bias[None]

    m_row = jnp.max(scores, axis=-1, keepdims=True)
    p = jnp.exp(scores - m_row)
    denom = jnp.sum(p, axis=-1, keepdims=True)                 # [nh, T, 1]

    # Un-normalized P@V (bf16 MXU, f32 accum); normalization deferred.
    attn = lax.dot_general(p.astype(jnp.bfloat16), v_win,
                           (((2,), (1,)), ((0,), (0,))),
                           preferred_element_type=jnp.float32)  # [nh, T, hd]
    attn = attn * pl.reciprocal(denom, approx=True)

    # Concatenate heads once -> [T, H]; single full-width out-projection.
    attn2d = jnp.concatenate([attn[h] for h in range(num_heads)], axis=-1)
    out = jnp.dot(attn2d.astype(jnp.bfloat16), wo_ref[...],
                  preferred_element_type=jnp.float32) + bo_ref[0]

    o_ref[0] = x_ref[0] + out                                  # residual (original x)


# ---------------------------------------------------------------------------
# Wrapper.
# ---------------------------------------------------------------------------
def _choose_seq_tile(seq_len, target):
    """Largest multiple-of-8 divisor of seq_len that is <= target, else seq_len."""
    best = None
    t = 8
    while t <= min(seq_len, target):
        if seq_len % t == 0:
            best = t
        t += 8
    return best if best is not None else seq_len


def fused_neighborhood_attention_layer(
    x, params, *, num_heads, kernel_size=7, dilation=1, scale=None,
    eps=1e-5, seq_tile=128,
):
    B, S, H = x.shape
    assert H % num_heads == 0
    head_dim = H // num_heads
    if scale is None:
        scale = 1.0 / math.sqrt(head_dim)
    gamma, beta, wq, bq, wk, bk, wv, bv, wo, bo = params

    T = _choose_seq_tile(S, seq_tile)
    nq = S // T
    half_win = (kernel_size // 2) * dilation
    n_side = -(-half_win // T) if half_win > 0 else 0
    n_slabs = 2 * n_side + 1

    bf16 = jnp.bfloat16
    wq_b, wk_b, wv_b, wo_b = (w.astype(bf16) for w in (wq, wk, wv, wo))

    cparams = pltpu.CompilerParams(
        dimension_semantics=("parallel", "parallel"),
        vmem_limit_bytes=48 * 1024 * 1024,     # fits v7x's 64 MiB with headroom
    )

    x_spec = pl.BlockSpec((1, T, H), lambda b, i: (b, i, 0))
    vec_spec = pl.BlockSpec((1, H), lambda b, i: (0, 0))
    mat_spec = pl.BlockSpec((H, H), lambda b, i: (0, 0))
    hm_spec = pl.BlockSpec((1, num_heads, T, head_dim), lambda b, i: (b, 0, i, 0))
    qkv_shape = jax.ShapeDtypeStruct((B, num_heads, S, head_dim), bf16)

    # ---- pass 1: LayerNorm + QKV projections (head-major bf16) ----
    q_hm, k_hm, v_hm = pl.pallas_call(
        functools.partial(_ln_qkv_kernel, num_heads=num_heads, head_dim=head_dim,
                          scale=float(scale), eps=float(eps)),
        out_shape=(qkv_shape, qkv_shape, qkv_shape),
        grid=(B, nq),
        in_specs=[x_spec, vec_spec, vec_spec,
                  mat_spec, vec_spec, mat_spec, vec_spec, mat_spec, vec_spec],
        out_specs=(hm_spec, hm_spec, hm_spec),
        compiler_params=cparams,
    )(x, gamma, beta, wq_b, bq, wk_b, bk, wv_b, bv)

    # ---- pass 2: banded attention over neighboring K/V slabs ----
    def make_slab_spec(offset):
        def imap(b, i):
            return (b, 0, jnp.clip(i + offset, 0, nq - 1), 0)
        return pl.BlockSpec((1, num_heads, T, head_dim), imap)

    slab_specs = [make_slab_spec(d) for d in range(-n_side, n_side + 1)]

    in_specs = ([x_spec, hm_spec] + slab_specs + slab_specs + [mat_spec, vec_spec])

    out = pl.pallas_call(
        functools.partial(_window_attn_kernel, num_heads=num_heads, seq_tile=T,
                          n_side=n_side, nq=nq, half_win=half_win,
                          dilation=dilation),
        out_shape=jax.ShapeDtypeStruct((B, S, H), jnp.float32),
        grid=(B, nq),
        in_specs=in_specs,
        out_specs=x_spec,
        compiler_params=cparams,
    )(x, q_hm, *([k_hm] * n_slabs), *([v_hm] * n_slabs), wo_b, bo)
    return out


# ---------------------------------------------------------------------------
# Pure-JAX reference (mirrors the PyTorch forward; same bf16 MXU-input casts).
# ---------------------------------------------------------------------------
def _reference(x, params, *, num_heads, kernel_size, dilation, scale=None, eps=1e-5):
    gamma, beta, wq, bq, wk, bk, wv, bv, wo, bo = params
    B, S, H = x.shape
    hd = H // num_heads
    if scale is None:
        scale = 1.0 / math.sqrt(hd)
    bf16 = jnp.bfloat16

    mean = x.mean(-1, keepdims=True)
    var = ((x - mean) ** 2).mean(-1, keepdims=True)
    xn = (x - mean) / jnp.sqrt(var + eps) * gamma[0] + beta[0]
    xn_b = xn.astype(bf16)

    def proj(w, b):
        return jnp.einsum("bsh,hd->bsd", xn_b, w.astype(bf16),
                          preferred_element_type=jnp.float32) + b[0]

    q = (proj(wq, bq) * scale).astype(bf16)
    k = proj(wk, bk).astype(bf16)
    v = proj(wv, bv).astype(bf16)
    q = q.reshape(B, S, num_heads, hd).transpose(0, 2, 1, 3)
    k = k.reshape(B, S, num_heads, hd).transpose(0, 2, 1, 3)
    v = v.reshape(B, S, num_heads, hd).transpose(0, 2, 1, 3)

    scores = jnp.einsum("bhqd,bhkd->bhqk", q, k, preferred_element_type=jnp.float32)
    i = jnp.arange(S)[:, None]
    j = jnp.arange(S)[None, :]
    rel = j - i
    hw = (kernel_size // 2) * dilation
    mask = (rel >= -hw) & (rel <= hw) & ((rel % dilation) == 0)
    scores = jnp.where(mask[None, None], scores, -jnp.inf)

    m = scores.max(-1, keepdims=True)
    p = jnp.exp(scores - m)
    denom = p.sum(-1, keepdims=True)
    attn = jnp.einsum("bhqk,bhkd->bhqd", p.astype(bf16), v,
                      preferred_element_type=jnp.float32) / denom
    attn = attn.transpose(0, 2, 1, 3).reshape(B, S, H)
    out = jnp.einsum("bsh,hd->bsd", attn.astype(bf16), wo.astype(bf16),
                     preferred_element_type=jnp.float32) + bo[0]
    return x + out


if __name__ == "__main__":
    B, S, H, NUM_HEADS = 2, 8, 32, 4

    key = jax.random.PRNGKey(0)
    keys = jax.random.split(key, 10)
    x = jax.random.normal(keys[0], (B, S, H), jnp.float32)

    gamma = jnp.ones((1, H), jnp.float32)     # nn.LayerNorm default init
    beta = jnp.zeros((1, H), jnp.float32)

    def _linear(kw, kb):
        w = jax.random.normal(kw, (H, H), jnp.float32) * (1.0 / math.sqrt(H))
        b = jax.random.normal(kb, (1, H), jnp.float32) * 0.02
        return w, b

    wq, bq = _linear(keys[1], keys[2])
    wk, bk = _linear(keys[3], keys[4])
    wv, bv = _linear(keys[5], keys[6])
    wo, bo = _linear(keys[7], keys[8])
    params = (gamma, beta, wq, bq, wk, bk, wv, bv, wo, bo)

    for ks, dil in ((5, 1), (3, 2)):
        out = fused_neighborhood_attention_layer(
            x, params, num_heads=NUM_HEADS, kernel_size=ks, dilation=dil)
        out = jax.block_until_ready(out)
        ref = _reference(
            x, params, num_heads=NUM_HEADS, kernel_size=ks, dilation=dil)
        assert out.shape == (B, S, H)
        assert jnp.allclose(out, ref, atol=2e-2, rtol=2e-2), \
            f"mismatch vs reference (kernel_size={ks}, dilation={dil})"

    print("KERNEL_OK")
</pallas_src>

<mosaic_0001>
module attributes {stable_mosaic.version = 11 : i64} {
  func.func @_ln_qkv_kernel(%arg0: i32, %arg1: i32, %arg2: memref<1x8x32xf32, #tpu.memory_space<vmem>>, %arg3: memref<1x32xf32, #tpu.memory_space<vmem>>, %arg4: memref<1x32xf32, #tpu.memory_space<vmem>>, %arg5: memref<32x32xbf16, #tpu.memory_space<vmem>>, %arg6: memref<1x32xf32, #tpu.memory_space<vmem>>, %arg7: memref<32x32xbf16, #tpu.memory_space<vmem>>, %arg8: memref<1x32xf32, #tpu.memory_space<vmem>>, %arg9: memref<32x32xbf16, #tpu.memory_space<vmem>>, %arg10: memref<1x32xf32, #tpu.memory_space<vmem>>, %arg11: memref<1x4x8x8xbf16, #tpu.memory_space<vmem>>, %arg12: memref<1x4x8x8xbf16, #tpu.memory_space<vmem>>, %arg13: memref<1x4x8x8xbf16, #tpu.memory_space<vmem>>) attributes {dimension_semantics = [#tpu.dimension_semantics<parallel>, #tpu.dimension_semantics<parallel>], iteration_bounds = array<i64: 2, 1>, scalar_prefetch = 0 : i64, scratch_operands = 0 : i64, tpu.core_type = #tpu.core_type<tc>, window_params = [{transform_indices = @transform_0, window_bounds = array<i64: 1, 8, 32>}, {pipeline_mode = #tpu.pipeline_mode<synchronous>, transform_indices = @transform_1, window_bounds = array<i64: 1, 32>}, {pipeline_mode = #tpu.pipeline_mode<synchronous>, transform_indices = @transform_2, window_bounds = array<i64: 1, 32>}, {pipeline_mode = #tpu.pipeline_mode<synchronous>, transform_indices = @transform_3, window_bounds = array<i64: 32, 32>}, {pipeline_mode = #tpu.pipeline_mode<synchronous>, transform_indices = @transform_4, window_bounds = array<i64: 1, 32>}, {pipeline_mode = #tpu.pipeline_mode<synchronous>, transform_indices = @transform_5, window_bounds = array<i64: 32, 32>}, {pipeline_mode = #tpu.pipeline_mode<synchronous>, transform_indices = @transform_6, window_bounds = array<i64: 1, 32>}, {pipeline_mode = #tpu.pipeline_mode<synchronous>, transform_indices = @transform_7, window_bounds = array<i64: 32, 32>}, {pipeline_mode = #tpu.pipeline_mode<synchronous>, transform_indices = @transform_8, window_bounds = array<i64: 1, 32>}, {transform_indices = @transform_9, window_bounds = array<i64: 1, 4, 8, 8>}, {transform_indices = @transform_10, window_bounds = array<i64: 1, 4, 8, 8>}, {transform_indices = @transform_11, window_bounds = array<i64: 1, 4, 8, 8>}]} {
    %c0 = arith.constant 0 : index
    %c0_0 = arith.constant 0 : index
    %c0_1 = arith.constant 0 : index
    %0 = vector.load %arg2[%c0, %c0_0, %c0_1] : memref<1x8x32xf32, #tpu.memory_space<vmem>>, vector<1x8x32xf32>
    %1 = vector.shape_cast %0 : vector<1x8x32xf32> to vector<8x32xf32>
    %cst = arith.constant dense<0.000000e+00> : vector<8xf32>
    %2 = vector.multi_reduction <add>, %1, %cst [1] : vector<8x32xf32> to vector<8xf32>
    %3 = vector.shape_cast %2 : vector<8xf32> to vector<8x1xf32>
    %cst_2 = arith.constant 3.200000e+01 : f32
    %4 = vector.broadcast %cst_2 : f32 to vector<8x1xf32>
    %5 = arith.divf %3, %4 : vector<8x1xf32>
    %6 = vector.broadcast %5 : vector<8x1xf32> to vector<8x32xf32>
    %7 = arith.subf %1, %6 : vector<8x32xf32>
    %8 = arith.mulf %7, %7 : vector<8x32xf32>
    %cst_3 = arith.constant dense<0.000000e+00> : vector<8xf32>
    %9 = vector.multi_reduction <add>, %8, %cst_3 [1] : vector<8x32xf32> to vector<8xf32>
    %10 = vector.shape_cast %9 : vector<8xf32> to vector<8x1xf32>
    %cst_4 = arith.constant 3.200000e+01 : f32
    %11 = vector.broadcast %cst_4 : f32 to vector<8x1xf32>
    %12 = arith.divf %10, %11 : vector<8x1xf32>
    %13 = vector.broadcast %5 : vector<8x1xf32> to vector<8x32xf32>
    %14 = arith.subf %1, %13 : vector<8x32xf32>
    %cst_5 = arith.constant 9.99999974E-6 : f32
    %15 = vector.broadcast %cst_5 : f32 to vector<8x1xf32>
    %16 = arith.addf %12, %15 : vector<8x1xf32>
    %17 = math.rsqrt %16 : vector<8x1xf32>
    %18 = vector.broadcast %17 : vector<8x1xf32> to vector<8x32xf32>
    %19 = arith.mulf %14, %18 : vector<8x32xf32>
    %c0_6 = arith.constant 0 : index
    %c0_7 = arith.constant 0 : index
    %20 = vector.load %arg3[%c0_6, %c0_7] : memref<1x32xf32, #tpu.memory_space<vmem>>, vector<1x32xf32>
    %21 = vector.shape_cast %20 : vector<1x32xf32> to vector<32xf32>
    %22 = vector.shape_cast %21 : vector<32xf32> to vector<1x32xf32>
    %23 = vector.broadcast %22 : vector<1x32xf32> to vector<8x32xf32>
    %24 = arith.mulf %19, %23 : vector<8x32xf32>
    %c0_8 = arith.constant 0 : index
    %c0_9 = arith.constant 0 : index
    %25 = vector.load %arg4[%c0_8, %c0_9] : memref<1x32xf32, #tpu.memory_space<vmem>>, vector<1x32xf32>
    %26 = vector.shape_cast %25 : vector<1x32xf32> to vector<32xf32>
    %27 = vector.shape_cast %26 : vector<32xf32> to vector<1x32xf32>
    %28 = vector.broadcast %27 : vector<1x32xf32> to vector<8x32xf32>
    %29 = arith.addf %24, %28 : vector<8x32xf32>
    %30 = arith.truncf %29 : vector<8x32xf32> to vector<8x32xbf16>
    %c0_10 = arith.constant 0 : index
    %c0_11 = arith.constant 0 : index
    %31 = vector.load %arg5[%c0_10, %c0_11] : memref<32x32xbf16, #tpu.memory_space<vmem>>, vector<32x32xbf16>
    %cst_12 = arith.constant dense<0.000000e+00> : vector<8x32xf32>
    %32 = tpu.matmul %30, %31, %cst_12 {dimension_numbers = #tpu.dot_dimension_numbers<[1], [0], [0], [1], [0, 0, 1, 1], [], []>} : vector<8x32xbf16>, vector<32x32xbf16>, vector<8x32xf32> -> vector<8x32xf32>
    %c0_13 = arith.constant 0 : index
    %c0_14 = arith.constant 0 : index
    %33 = vector.load %arg6[%c0_13, %c0_14] : memref<1x32xf32, #tpu.memory_space<vmem>>, vector<1x32xf32>
    %34 = vector.shape_cast %33 : vector<1x32xf32> to vector<32xf32>
    %35 = vector.shape_cast %34 : vector<32xf32> to vector<1x32xf32>
    %36 = vector.broadcast %35 : vector<1x32xf32> to vector<8x32xf32>
    %37 = arith.addf %32, %36 : vector<8x32xf32>
    %c0_15 = arith.constant 0 : index
    %c0_16 = arith.constant 0 : index
    %38 = vector.load %arg7[%c0_15, %c0_16] : memref<32x32xbf16, #tpu.memory_space<vmem>>, vector<32x32xbf16>
    %cst_17 = arith.constant dense<0.000000e+00> : vector<8x32xf32>
    %39 = tpu.matmul %30, %38, %cst_17 {dimension_numbers = #tpu.dot_dimension_numbers<[1], [0], [0], [1], [0, 0, 1, 1], [], []>} : vector<8x32xbf16>, vector<32x32xbf16>, vector<8x32xf32> -> vector<8x32xf32>
    %c0_18 = arith.constant 0 : index
    %c0_19 = arith.constant 0 : index
    %40 = vector.load %arg8[%c0_18, %c0_19] : memref<1x32xf32, #tpu.memory_space<vmem>>, vector<1x32xf32>
    %41 = vector.shape_cast %40 : vector<1x32xf32> to vector<32xf32>
    %42 = vector.shape_cast %41 : vector<32xf32> to vector<1x32xf32>
    %43 = vector.broadcast %42 : vector<1x32xf32> to vector<8x32xf32>
    %44 = arith.addf %39, %43 : vector<8x32xf32>
    %c0_20 = arith.constant 0 : index
    %c0_21 = arith.constant 0 : index
    %45 = vector.load %arg9[%c0_20, %c0_21] : memref<32x32xbf16, #tpu.memory_space<vmem>>, vector<32x32xbf16>
    %cst_22 = arith.constant dense<0.000000e+00> : vector<8x32xf32>
    %46 = tpu.matmul %30, %45, %cst_22 {dimension_numbers = #tpu.dot_dimension_numbers<[1], [0], [0], [1], [0, 0, 1, 1], [], []>} : vector<8x32xbf16>, vector<32x32xbf16>, vector<8x32xf32> -> vector<8x32xf32>
    %c0_23 = arith.constant 0 : index
    %c0_24 = arith.constant 0 : index
    %47 = vector.load %arg10[%c0_23, %c0_24] : memref<1x32xf32, #tpu.memory_space<vmem>>, vector<1x32xf32>
    %48 = vector.shape_cast %47 : vector<1x32xf32> to vector<32xf32>
    %49 = vector.shape_cast %48 : vector<32xf32> to vector<1x32xf32>
    %50 = vector.broadcast %49 : vector<1x32xf32> to vector<8x32xf32>
    %51 = arith.addf %46, %50 : vector<8x32xf32>
    %cst_25 = arith.constant 0.353553385 : f32
    %52 = vector.broadcast %cst_25 : f32 to vector<8x32xf32>
    %53 = arith.mulf %37, %52 : vector<8x32xf32>
    %54 = vector.extract_strided_slice %53 {offsets = [0, 0], sizes = [8, 8], strides = [1, 1]} : vector<8x32xf32> to vector<8x8xf32>
    %55 = vector.extract_strided_slice %53 {offsets = [0, 8], sizes = [8, 8], strides = [1, 1]} : vector<8x32xf32> to vector<8x8xf32>
    %56 = vector.extract_strided_slice %53 {offsets = [0, 16], sizes = [8, 8], strides = [1, 1]} : vector<8x32xf32> to vector<8x8xf32>
    %57 = vector.extract_strided_slice %53 {offsets = [0, 24], sizes = [8, 8], strides = [1, 1]} : vector<8x32xf32> to vector<8x8xf32>
    %58 = vector.shape_cast %54 : vector<8x8xf32> to vector<1x8x8xf32>
    %59 = vector.shape_cast %55 : vector<8x8xf32> to vector<1x8x8xf32>
    %60 = vector.shape_cast %56 : vector<8x8xf32> to vector<1x8x8xf32>
    %61 = vector.shape_cast %57 : vector<8x8xf32> to vector<1x8x8xf32>
    %62 = tpu.concatenate %58, %59, %60, %61 in 0 : vector<1x8x8xf32>, vector<1x8x8xf32>, vector<1x8x8xf32>, vector<1x8x8xf32> -> vector<4x8x8xf32>
    %63 = arith.truncf %62 : vector<4x8x8xf32> to vector<4x8x8xbf16>
    %c0_26 = arith.constant 0 : index
    %c0_27 = arith.constant 0 : index
    %c0_28 = arith.constant 0 : index
    %c0_29 = arith.constant 0 : index
    %64 = vector.load %arg11[%c0_26, %c0_27, %c0_28, %c0_29] : memref<1x4x8x8xbf16, #tpu.memory_space<vmem>>, vector<1x4x8x8xbf16>
    %65 = vector.shape_cast %64 : vector<1x4x8x8xbf16> to vector<4x8x8xbf16>
    %66 = vector.shape_cast %63 : vector<4x8x8xbf16> to vector<1x4x8x8xbf16>
    tpu.vector_store %arg11[%c0_26, %c0_27, %c0_28, %c0_29], %66 {strides = array<i32>} : memref<1x4x8x8xbf16, #tpu.memory_space<vmem>>, vector<1x4x8x8xbf16>,
    %67 = vector.extract_strided_slice %44 {offsets = [0, 0], sizes = [8, 8], strides = [1, 1]} : vector<8x32xf32> to vector<8x8xf32>
    %68 = vector.extract_strided_slice %44 {offsets = [0, 8], sizes = [8, 8], strides = [1, 1]} : vector<8x32xf32> to vector<8x8xf32>
    %69 = vector.extract_strided_slice %44 {offsets = [0, 16], sizes = [8, 8], strides = [1, 1]} : vector<8x32xf32> to vector<8x8xf32>
    %70 = vector.extract_strided_slice %44 {offsets = [0, 24], sizes = [8, 8], strides = [1, 1]} : vector<8x32xf32> to vector<8x8xf32>
    %71 = vector.shape_cast %67 : vector<8x8xf32> to vector<1x8x8xf32>
    %72 = vector.shape_cast %68 : vector<8x8xf32> to vector<1x8x8xf32>
    %73 = vector.shape_cast %69 : vector<8x8xf32> to vector<1x8x8xf32>
    %74 = vector.shape_cast %70 : vector<8x8xf32> to vector<1x8x8xf32>
    %75 = tpu.concatenate %71, %72, %73, %74 in 0 : vector<1x8x8xf32>, vector<1x8x8xf32>, vector<1x8x8xf32>, vector<1x8x8xf32> -> vector<4x8x8xf32>
    %76 = arith.truncf %75 : vector<4x8x8xf32> to vector<4x8x8xbf16>
    %c0_30 = arith.constant 0 : index
    %c0_31 = arith.constant 0 : index
    %c0_32 = arith.constant 0 : index
    %c0_33 = arith.constant 0 : index
    %77 = vector.load %arg12[%c0_30, %c0_31, %c0_32, %c0_33] : memref<1x4x8x8xbf16, #tpu.memory_space<vmem>>, vector<1x4x8x8xbf16>
    %78 = vector.shape_cast %77 : vector<1x4x8x8xbf16> to vector<4x8x8xbf16>
    %79 = vector.shape_cast %76 : vector<4x8x8xbf16> to vector<1x4x8x8xbf16>
    tpu.vector_store %arg12[%c0_30, %c0_31, %c0_32, %c0_33], %79 {strides = array<i32>} : memref<1x4x8x8xbf16, #tpu.memory_space<vmem>>, vector<1x4x8x8xbf16>,
    %80 = vector.extract_strided_slice %51 {offsets = [0, 0], sizes = [8, 8], strides = [1, 1]} : vector<8x32xf32> to vector<8x8xf32>
    %81 = vector.extract_strided_slice %51 {offsets = [0, 8], sizes = [8, 8], strides = [1, 1]} : vector<8x32xf32> to vector<8x8xf32>
    %82 = vector.extract_strided_slice %51 {offsets = [0, 16], sizes = [8, 8], strides = [1, 1]} : vector<8x32xf32> to vector<8x8xf32>
    %83 = vector.extract_strided_slice %51 {offsets = [0, 24], sizes = [8, 8], strides = [1, 1]} : vector<8x32xf32> to vector<8x8xf32>
    %84 = vector.shape_cast %80 : vector<8x8xf32> to vector<1x8x8xf32>
    %85 = vector.shape_cast %81 : vector<8x8xf32> to vector<1x8x8xf32>
    %86 = vector.shape_cast %82 : vector<8x8xf32> to vector<1x8x8xf32>
    %87 = vector.shape_cast %83 : vector<8x8xf32> to vector<1x8x8xf32>
    %88 = tpu.concatenate %84, %85, %86, %87 in 0 : vector<1x8x8xf32>, vector<1x8x8xf32>, vector<1x8x8xf32>, vector<1x8x8xf32> -> vector<4x8x8xf32>
    %89 = arith.truncf %88 : vector<4x8x8xf32> to vector<4x8x8xbf16>
    %c0_34 = arith.constant 0 : index
    %c0_35 = arith.constant 0 : index
    %c0_36 = arith.constant 0 : index
    %c0_37 = arith.constant 0 : index
    %90 = vector.load %arg13[%c0_34, %c0_35, %c0_36, %c0_37] : memref<1x4x8x8xbf16, #tpu.memory_space<vmem>>, vector<1x4x8x8xbf16>
    %91 = vector.shape_cast %90 : vector<1x4x8x8xbf16> to vector<4x8x8xbf16>
    %92 = vector.shape_cast %89 : vector<4x8x8xbf16> to vector<1x4x8x8xbf16>
    tpu.vector_store %arg13[%c0_34, %c0_35, %c0_36, %c0_37], %92 {strides = array<i32>} : memref<1x4x8x8xbf16, #tpu.memory_space<vmem>>, vector<1x4x8x8xbf16>,
    return
  }
  func.func @transform_0(%arg0: i32, %arg1: i32) -> (i32, i32, i32) {
    %c0_i32 = arith.constant 0 : i32
    %c0_i32_0 = arith.constant 0 : i32
    return %arg0, %arg1, %c0_i32 : i32, i32, i32
  }
  func.func @transform_1(%arg0: i32, %arg1: i32) -> (i32, i32) {
    %c0_i32 = arith.constant 0 : i32
    %c0_i32_0 = arith.constant 0 : i32
    %c0_i32_1 = arith.constant 0 : i32
    return %c0_i32, %c0_i32_0 : i32, i32
  }
  func.func @transform_2(%arg0: i32, %arg1: i32) -> (i32, i32) {
    %c0_i32 = arith.constant 0 : i32
    %c0_i32_0 = arith.constant 0 : i32
    %c0_i32_1 = arith.constant 0 : i32
    return %c0_i32, %c0_i32_0 : i32, i32
  }
  func.func @transform_3(%arg0: i32, %arg1: i32) -> (i32, i32) {
    %c0_i32 = arith.constant 0 : i32
    %c0_i32_0 = arith.constant 0 : i32
    %c0_i32_1 = arith.constant 0 : i32
    return %c0_i32, %c0_i32_0 : i32, i32
  }
  func.func @transform_4(%arg0: i32, %arg1: i32) -> (i32, i32) {
    %c0_i32 = arith.constant 0 : i32
    %c0_i32_0 = arith.constant 0 : i32
    %c0_i32_1 = arith.constant 0 : i32
    return %c0_i32, %c0_i32_0 : i32, i32
  }
  func.func @transform_5(%arg0: i32, %arg1: i32) -> (i32, i32) {
    %c0_i32 = arith.constant 0 : i32
    %c0_i32_0 = arith.constant 0 : i32
    %c0_i32_1 = arith.constant 0 : i32
    return %c0_i32, %c0_i32_0 : i32, i32
  }
  func.func @transform_6(%arg0: i32, %arg1: i32) -> (i32, i32) {
    %c0_i32 = arith.constant 0 : i32
    %c0_i32_0 = arith.constant 0 : i32
    %c0_i32_1 = arith.constant 0 : i32
    return %c0_i32, %c0_i32_0 : i32, i32
  }
  func.func @transform_7(%arg0: i32, %arg1: i32) -> (i32, i32) {
    %c0_i32 = arith.constant 0 : i32
    %c0_i32_0 = arith.constant 0 : i32
    %c0_i32_1 = arith.constant 0 : i32
    return %c0_i32, %c0_i32_0 : i32, i32
  }
  func.func @transform_8(%arg0: i32, %arg1: i32) -> (i32, i32) {
    %c0_i32 = arith.constant 0 : i32
    %c0_i32_0 = arith.constant 0 : i32
    %c0_i32_1 = arith.constant 0 : i32
    return %c0_i32, %c0_i32_0 : i32, i32
  }
  func.func @transform_9(%arg0: i32, %arg1: i32) -> (i32, i32, i32, i32) {
    %c0_i32 = arith.constant 0 : i32
    %c0_i32_0 = arith.constant 0 : i32
    %c0_i32_1 = arith.constant 0 : i32
    return %arg0, %c0_i32, %arg1, %c0_i32_0 : i32, i32, i32, i32
  }
  func.func @transform_10(%arg0: i32, %arg1: i32) -> (i32, i32, i32, i32) {
    %c0_i32 = arith.constant 0 : i32
    %c0_i32_0 = arith.constant 0 : i32
    %c0_i32_1 = arith.constant 0 : i32
    return %arg0, %c0_i32, %arg1, %c0_i32_0 : i32, i32, i32, i32
  }
  func.func @transform_11(%arg0: i32, %arg1: i32) -> (i32, i32, i32, i32) {
    %c0_i32 = arith.constant 0 : i32
    %c0_i32_0 = arith.constant 0 : i32
    %c0_i32_1 = arith.constant 0 : i32
    return %arg0, %c0_i32, %arg1, %c0_i32_0 : i32, i32, i32, i32
  }
}

</mosaic_0001>

<llo_original>
// kernel: tpu_custom_call.1
$region0: #{tpu_custom_call.1}
  #allocation0 [shape = 'u32[]', space=smem, size = 0x4, offset = 0x4, fixed_abs, tag = 'smem constant byte address 0x4 - core index']
  #allocation1 [shape = 'u32[144,128]{1,0:T(1,128)}', space=vmem, size = 0x12000, scoped, tag = 'internal scratch']
  %s0 = inlined_call_operand.hbm [shape: f32[2,8,32], index: 0, kind: input, shape index: {}]
  %s1 = inlined_call_operand.vmem [shape: f32[1,32], index: 1, kind: input, shape index: {}]
  %s2 = inlined_call_operand.vmem [shape: f32[1,32], index: 2, kind: input, shape index: {}]
  %s3 = inlined_call_operand.hbm [shape: bf16[32,32], index: 3, kind: input, shape index: {}]
  %s4 = inlined_call_operand.vmem [shape: f32[1,32], index: 4, kind: input, shape index: {}]
  %s5 = inlined_call_operand.hbm [shape: bf16[32,32], index: 5, kind: input, shape index: {}]
  %s6 = inlined_call_operand.vmem [shape: f32[1,32], index: 6, kind: input, shape index: {}]
  %s7 = inlined_call_operand.hbm [shape: bf16[32,32], index: 7, kind: input, shape index: {}]
  %s8 = inlined_call_operand.vmem [shape: f32[1,32], index: 8, kind: input, shape index: {}]
  %s9 = inlined_call_operand.hbm [shape: bf16[2,4,8,8], index: 9, kind: output, shape index: {0}]
  %s10 = inlined_call_operand.hbm [shape: bf16[2,4,8,8], index: 10, kind: output, shape index: {1}]
  %s11 = inlined_call_operand.hbm [shape: bf16[2,4,8,8], index: 11, kind: output, shape index: {2}]
  %12 = xla_tuple %s9, %s10, %s11
  %s13 = sld [smem:[#allocation0]]
  $region101: #{tpu_custom_call.1} parent=0
    _
  %s15 = ssub.s32 1, %s13
  %s16 = scalar_select 0, %s15, %s13
  $region1: #{tpu_custom_call.1} parent=0
    #allocation2 [shape = 'u8[8192]{0}', space=vmem, size = 0x2000, scoped, tag = 'input window, operand 0']
    #allocation3 [shape = 's32[2]{0}', space=sflag, size = 0x8, scoped, tag = 'scoped memory for tpu_custom_call.1']
    #allocation4 [shape = 's32[2]{0}', space=sflag, size = 0x8, scoped, tag = 'scoped memory for tpu_custom_call.1']
    #allocation5 [shape = 'u8[8192]{0}', space=vmem, size = 0x2000, scoped, tag = 'input window, operand 3, single buffered']
    #allocation6 [shape = 's32[1]{0}', space=sflag, size = 0x4, scoped, tag = 'scoped memory for tpu_custom_call.1']
    #allocation7 [shape = 'u8[8192]{0}', space=vmem, size = 0x2000, scoped, tag = 'input window, operand 5, single buffered']
    #allocation8 [shape = 'u8[8192]{0}', space=vmem, size = 0x2000, scoped, tag = 'input window, operand 7, single buffered']
    #allocation9 [shape = 's32[1]{0}', space=sflag, size = 0x4, scoped, tag = 'scoped memory for tpu_custom_call.1']
    #allocation10 [shape = 'u8[16384]{0}', space=vmem, size = 0x4000, scoped, tag = 'output window, operand 0']
    #allocation11 [shape = 'u8[16384]{0}', space=vmem, size = 0x4000, scoped, tag = 'output window, operand 1']
    #allocation12 [shape = 's32[2]{0}', space=sflag, size = 0x8, scoped, tag = 'scoped memory for tpu_custom_call.1']
    #allocation13 [shape = 'u8[16384]{0}', space=vmem, size = 0x4000, scoped, tag = 'output window, operand 2']
    %17 = vsyncpa [#allocation3], 0
    %s18 = scalar_lea.sflag [#allocation3], 1
    %19 = vsyncpa %s18, 0
    %20 = vsyncpa [#allocation6], 0
    %21 = vsyncpa [#allocation9], 0
    %22 = vsyncpa [#allocation4], 0
    %s23 = scalar_lea.sflag [#allocation4], 1
    %24 = vsyncpa %s23, 0
    %25 = vsyncpa [#allocation12], 0
    %s26 = scalar_lea.sflag [#allocation12], 1
    %27 = vsyncpa %s26, 0
    loop: start=0, step=1, limit=4
    $region2: #{tpu_custom_call.1} parent=1 // loop_pre_header
      _
    $region3: #{tpu_custom_call.1} parent=1 // loop_header
      %s29 = sphi 0, %s33
      %p30 = scmp.ge.s32.totalorder %s29, 4
      %s36 = sphi 0, %s48
      %s37 = sphi 0, %s44
      %s38 = sphi 0, %s36
      %s39 = sphi 0, %s37
      %s40 = sphi 0, %s38
      %s41 = sphi 0, %s39
      %s53 = sphi 0, %s55
      %s56 = sphi 0, %s53
      %s57 = sphi 0, %s56
      %s73 = sphi 0, %s57
      %s77 = sphi 0, %s77
      %s79 = sphi 0, %s77
      %s80 = sphi 0, %s79
      %s94 = sphi 0, %s80
      %s98 = sphi 0, %s98
      %s100 = sphi 0, %s98
      %s101 = sphi 0, %s100
      %s115 = sphi 0, %s101
      %s119 = sphi 0, %s119
      %s121 = sphi 0, %s119
      %s122 = sphi 0, %s121
      %s136 = sphi 0, %s122
      %s140 = sphi 0, %s140
      %s142 = sphi 0, %s140
      %s143 = sphi 0, %s142
      %s157 = sphi 0, %s143
      %s161 = sphi 0, %s161
      %s163 = sphi 0, %s161
      %s164 = sphi 0, %s163
      %s178 = sphi 0, %s164
      %s182 = sphi 0, %s182
      %s184 = sphi 0, %s182
      %s185 = sphi 0, %s184
      %s199 = sphi 0, %s185
      %s203 = sphi 0, %s203
      %s205 = sphi 0, %s203
      %s206 = sphi 0, %s205
      %s220 = sphi 0, %s206
      %s224 = sphi 0, %s224
      %s226 = sphi 0, %s224
      %s227 = sphi 0, %s226
      %s241 = sphi 0, %s227
      %s249 = sphi 0, %s251
      %s252 = sphi 0, %s249
      %s253 = sphi 0, %s252
      %s269 = sphi 0, %s253
      %s277 = sphi 0, %s279
      %s280 = sphi 0, %s277
      %s281 = sphi 0, %s280
      %s297 = sphi 0, %s281
      %s305 = sphi 0, %s307
      %s308 = sphi 0, %s305
      %s309 = sphi 0, %s308
      %s325 = sphi 0, %s309
    $region4: #{tpu_custom_call.1} parent=1 // loop_header_branch
      %32 = sbr.rel (%p30) target = $region8
    $region5: #{tpu_custom_call.1} parent=1 // loop_body
      %s34 = ssub.s32 %s29, 1
      %s35 = ssub.s32 %s29, 2
      %s42 = sadd.s32 1, %s37
      %p43 = scmp.ge.s32.totalorder %s42, 1
      %s44 = scalar_select %p43, 0, %s42
      %s45 = sadd.s32 1, %s36
      %s46 = scalar_select %p43, %s45, %s36
      %p47 = scmp.ge.s32.totalorder %s46, 2
      %s48 = scalar_select %p47, 0, %s46
      %s49 = ssub.s32 %s36, %s48
      %s50 = ssub.s32 %s37, %s44
      %s51 = sor.u32 %s49, %s50
      %p52 = scmp.eq.s32.totalorder %s51, 0
      %s54 = sadd.s32 %s53, 1
      %s55 = scalar_select %p52, %s53, %s54
      %p58 = pneg %p52
      %p59 = scmp.eq.s32.totalorder %s29, 1
      %p60 = por %p58, %p59
      %p61 = scmp.ne.s32.totalorder %s53, %s56
      %p62 = scmp.eq.s32.totalorder %s29, 0
      %p63 = por %p61, %p62
      %p64 = scmp.ne.s32.totalorder %s53, %s56
      %p65 = scmp.eq.s32.totalorder %s34, 1
      %p66 = por %p64, %p65
      %p67 = scmp.ne.s32.totalorder %s56, %s57
      %p68 = scmp.eq.s32.totalorder %s34, 0
      %p69 = por %p67, %p68
      %p70 = scmp.ne.s32.totalorder %s56, %s57
      %p71 = scmp.eq.s32.totalorder %s35, 1
      %p72 = por %p70, %p71
      %p74 = scmp.ne.s32.totalorder %s57, %s73
      %p75 = scmp.eq.s32.totalorder %s35, 0
      %p76 = por %p74, %p75
      %s78 = sadd.s32 %s77, 1
      %p81 = scmp.eq.s32.totalorder %s29, 1
      %p82 = scmp.ne.s32.totalorder %s77, %s79
      %p83 = scmp.eq.s32.totalorder %s29, 0
      %p84 = por %p82, %p83
      %p85 = scmp.ne.s32.totalorder %s77, %s79
      %p86 = scmp.eq.s32.totalorder %s34, 1
      %p87 = por %p85, %p86
      %p88 = scmp.ne.s32.totalorder %s79, %s80
      %p89 = scmp.eq.s32.totalorder %s34, 0
      %p90 = por %p88, %p89
      %p91 = scmp.ne.s32.totalorder %s79, %s80
      %p92 = scmp.eq.s32.totalorder %s35, 1
      %p93 = por %p91, %p92
      %p95 = scmp.ne.s32.totalorder %s80, %s94
      %p96 = scmp.eq.s32.totalorder %s35, 0
      %p97 = por %p95, %p96
      %s99 = sadd.s32 %s98, 1
      %p102 = scmp.eq.s32.totalorder %s29, 1
      %p103 = scmp.ne.s32.totalorder %s98, %s100
      %p104 = scmp.eq.s32.totalorder %s29, 0
      %p105 = por %p103, %p104
      %p106 = scmp.ne.s32.totalorder %s98, %s100
      %p107 = scmp.eq.s32.totalorder %s34, 1
      %p108 = por %p106, %p107
      %p109 = scmp.ne.s32.totalorder %s100, %s101
      %p110 = scmp.eq.s32.totalorder %s34, 0
      %p111 = por %p109, %p110
      %p112 = scmp.ne.s32.totalorder %s100, %s101
      %p113 = scmp.eq.s32.totalorder %s35, 1
      %p114 = por %p112, %p113
      %p116 = scmp.ne.s32.totalorder %s101, %s115
      %p117 = scmp.eq.s32.totalorder %s35, 0
      %p118 = por %p116, %p117
      %s120 = sadd.s32 %s119, 1
      %p123 = scmp.eq.s32.totalorder %s29, 1
      %p124 = scmp.ne.s32.totalorder %s119, %s121
      %p125 = scmp.eq.s32.totalorder %s29, 0
      %p126 = por %p124, %p125
      %p127 = scmp.ne.s32.totalorder %s119, %s121
      %p128 = scmp.eq.s32.totalorder %s34, 1
      %p129 = por %p127, %p128
      %p130 = scmp.ne.s32.totalorder %s121, %s122
      %p131 = scmp.eq.s32.totalorder %s34, 0
      %p132 = por %p130, %p131
      %p133 = scmp.ne.s32.totalorder %s121, %s122
      %p134 = scmp.eq.s32.totalorder %s35, 1
      %p135 = por %p133, %p134
      %p137 = scmp.ne.s32.totalorder %s122, %s136
      %p138 = scmp.eq.s32.totalorder %s35, 0
      %p139 = por %p137, %p138
      %s141 = sadd.s32 %s140, 1
      %p144 = scmp.eq.s32.totalorder %s29, 1
      %p145 = scmp.ne.s32.totalorder %s140, %s142
      %p146 = scmp.eq.s32.totalorder %s29, 0
      %p147 = por %p145, %p146
      %p148 = scmp.ne.s32.totalorder %s140, %s142
      %p149 = scmp.eq.s32.totalorder %s34, 1
      %p150 = por %p148, %p149
      %p151 = scmp.ne.s32.totalorder %s142, %s143
      %p152 = scmp.eq.s32.totalorder %s34, 0
      %p153 = por %p151, %p152
      %p154 = scmp.ne.s32.totalorder %s142, %s143
      %p155 = scmp.eq.s32.totalorder %s35, 1
      %p156 = por %p154, %p155
      %p158 = scmp.ne.s32.totalorder %s143, %s157
      %p159 = scmp.eq.s32.totalorder %s35, 0
      %p160 = por %p158, %p159
      %s162 = sadd.s32 %s161, 1
      %p165 = scmp.eq.s32.totalorder %s29, 1
      %p166 = scmp.ne.s32.totalorder %s161, %s163
      %p167 = scmp.eq.s32.totalorder %s29, 0
      %p168 = por %p166, %p167
      %p169 = scmp.ne.s32.totalorder %s161, %s163
      %p170 = scmp.eq.s32.totalorder %s34, 1
      %p171 = por %p169, %p170
      %p172 = scmp.ne.s32.totalorder %s163, %s164
      %p173 = scmp.eq.s32.totalorder %s34, 0
      %p174 = por %p172, %p173
      %p175 = scmp.ne.s32.totalorder %s163, %s164
      %p176 = scmp.eq.s32.totalorder %s35, 1
      %p177 = por %p175, %p176
      %p179 = scmp.ne.s32.totalorder %s164, %s178
      %p180 = scmp.eq.s32.totalorder %s35, 0
      %p181 = por %p179, %p180
      %s183 = sadd.s32 %s182, 1
      %p186 = scmp.eq.s32.totalorder %s29, 1
      %p187 = scmp.ne.s32.totalorder %s182, %s184
      %p188 = scmp.eq.s32.totalorder %s29, 0
      %p189 = por %p187, %p188
      %p190 = scmp.ne.s32.totalorder %s182, %s184
      %p191 = scmp.eq.s32.totalorder %s34, 1
      %p192 = por %p190, %p191
      %p193 = scmp.ne.s32.totalorder %s184, %s185
      %p194 = scmp.eq.s32.totalorder %s34, 0
      %p195 = por %p193, %p194
      %p196 = scmp.ne.s32.totalorder %s184, %s185
      %p197 = scmp.eq.s32.totalorder %s35, 1
      %p198 = por %p196, %p197
      %p200 = scmp.ne.s32.totalorder %s185, %s199
      %p201 = scmp.eq.s32.totalorder %s35, 0
      %p202 = por %p200, %p201
      %s204 = sadd.s32 %s203, 1
      %p207 = scmp.eq.s32.totalorder %s29, 1
      %p208 = scmp.ne.s32.totalorder %s203, %s205
      %p209 = scmp.eq.s32.totalorder %s29, 0
      %p210 = por %p208, %p209
      %p211 = scmp.ne.s32.totalorder %s203, %s205
      %p212 = scmp.eq.s32.totalorder %s34, 1
      %p213 = por %p211, %p212
      %p214 = scmp.ne.s32.totalorder %s205, %s206
      %p215 = scmp.eq.s32.totalorder %s34, 0
      %p216 = por %p214, %p215
      %p217 = scmp.ne.s32.totalorder %s205, %s206
      %p218 = scmp.eq.s32.totalorder %s35, 1
      %p219 = por %p217, %p218
      %p221 = scmp.ne.s32.totalorder %s206, %s220
      %p222 = scmp.eq.s32.totalorder %s35, 0
      %p223 = por %p221, %p222
      %s225 = sadd.s32 %s224, 1
      %p228 = scmp.eq.s32.totalorder %s29, 1
      %p229 = scmp.ne.s32.totalorder %s224, %s226
      %p230 = scmp.eq.s32.totalorder %s29, 0
      %p231 = por %p229, %p230
      %p232 = scmp.ne.s32.totalorder %s224, %s226
      %p233 = scmp.eq.s32.totalorder %s34, 1
      %p234 = por %p232, %p233
      %p235 = scmp.ne.s32.totalorder %s226, %s227
      %p236 = scmp.eq.s32.totalorder %s34, 0
      %p237 = por %p235, %p236
      %p238 = scmp.ne.s32.totalorder %s226, %s227
      %p239 = scmp.eq.s32.totalorder %s35, 1
      %p240 = por %p238, %p239
      %p242 = scmp.ne.s32.totalorder %s227, %s241
      %p243 = scmp.eq.s32.totalorder %s35, 0
      %p244 = por %p242, %p243
      %s245 = ssub.s32 %s36, %s48
      %s246 = ssub.s32 %s37, %s44
      %s247 = sor.u32 %s245, %s246
      %p248 = scmp.eq.s32.totalorder %s247, 0
      %s250 = sadd.s32 %s249, 1
      %s251 = scalar_select %p248, %s249, %s250
      %p254 = pneg %p248
      %p255 = scmp.eq.s32.totalorder %s29, 1
      %p256 = por %p254, %p255
      %p257 = scmp.ne.s32.totalorder %s249, %s252
      %p258 = scmp.eq.s32.totalorder %s29, 0
      %p259 = por %p257, %p258
      %p260 = scmp.ne.s32.totalorder %s249, %s252
      %p261 = scmp.eq.s32.totalorder %s34, 1
      %p262 = por %p260, %p261
      %p263 = scmp.ne.s32.totalorder %s252, %s253
      %p264 = scmp.eq.s32.totalorder %s34, 0
      %p265 = por %p263, %p264
      %p266 = scmp.ne.s32.totalorder %s252, %s253
      %p267 = scmp.eq.s32.totalorder %s35, 1
      %p268 = por %p266, %p267
      %p270 = scmp.ne.s32.totalorder %s253, %s269
      %p271 = scmp.eq.s32.totalorder %s35, 0
      %p272 = por %p270, %p271
      %s273 = ssub.s32 %s36, %s48
      %s274 = ssub.s32 %s37, %s44
      %s275 = sor.u32 %s273, %s274
      %p276 = scmp.eq.s32.totalorder %s275, 0
      %s278 = sadd.s32 %s277, 1
      %s279 = scalar_select %p276, %s277, %s278
      %p282 = pneg %p276
      %p283 = scmp.eq.s32.totalorder %s29, 1
      %p284 = por %p282, %p283
      %p285 = scmp.ne.s32.totalorder %s277, %s280
      %p286 = scmp.eq.s32.totalorder %s29, 0
      %p287 = por %p285, %p286
      %p288 = scmp.ne.s32.totalorder %s277, %s280
      %p289 = scmp.eq.s32.totalorder %s34, 1
      %p290 = por %p288, %p289
      %p291 = scmp.ne.s32.totalorder %s280, %s281
      %p292 = scmp.eq.s32.totalorder %s34, 0
      %p293 = por %p291, %p292
      %p294 = scmp.ne.s32.totalorder %s280, %s281
      %p295 = scmp.eq.s32.totalorder %s35, 1
      %p296 = por %p294, %p295
      %p298 = scmp.ne.s32.totalorder %s281, %s297
      %p299 = scmp.eq.s32.totalorder %s35, 0
      %p300 = por %p298, %p299
      %s301 = ssub.s32 %s36, %s48
      %s302 = ssub.s32 %s37, %s44
      %s303 = sor.u32 %s301, %s302
      %p304 = scmp.eq.s32.totalorder %s303, 0
      %s306 = sadd.s32 %s305, 1
      %s307 = scalar_select %p304, %s305, %s306
      %p310 = pneg %p304
      %p311 = scmp.eq.s32.totalorder %s29, 1
      %p312 = por %p310, %p311
      %p313 = scmp.ne.s32.totalorder %s305, %s308
      %p314 = scmp.eq.s32.totalorder %s29, 0
      %p315 = por %p313, %p314
      %p316 = scmp.ne.s32.totalorder %s305, %s308
      %p317 = scmp.eq.s32.totalorder %s34, 1
      %p318 = por %p316, %p317
      %p319 = scmp.ne.s32.totalorder %s308, %s309
      %p320 = scmp.eq.s32.totalorder %s34, 0
      %p321 = por %p319, %p320
      %p322 = scmp.ne.s32.totalorder %s308, %s309
      %p323 = scmp.eq.s32.totalorder %s35, 1
      %p324 = por %p322, %p323
      %p326 = scmp.ne.s32.totalorder %s309, %s325
      %p327 = scmp.eq.s32.totalorder %s35, 0
      %p328 = por %p326, %p327
      %p329 = scmp.le.s32.totalorder 1, %s29
      %p330 = scmp.lt.s32.totalorder %s29, 3
      %p331 = pnand %p329, %p330
      %p332 = pneg %p331
      // Predicated region
      $region9: #{tpu_custom_call.1} parent=5 // pred_check
        _
      $region10: #{tpu_custom_call.1} parent=5 // pred_check_branch
        %334 = sbr.rel (%p331) target = $region12
      $region11: #{tpu_custom_call.1} parent=5 // pred_region
        %s335 = ssub.s32 %s29, 1
        // Predicated region
        $region13: #{tpu_custom_call.1} parent=11 // pred_check
          %p336 = pneg %p90
        $region14: #{tpu_custom_call.1} parent=11 // pred_check_branch
          %338 = sbr.rel (%p336) target = $region16
        $region15: #{tpu_custom_call.1} parent=11 // pred_region
          _
        $region16: #{tpu_custom_call.1} parent=11 // pred_fallthru
          _
        // Predicated region
        $region17: #{tpu_custom_call.1} parent=11 // pred_check
          %p339 = pneg %p111
        $region18: #{tpu_custom_call.1} parent=11 // pred_check_branch
          %341 = sbr.rel (%p339) target = $region20
        $region19: #{tpu_custom_call.1} parent=11 // pred_region
          _
        $region20: #{tpu_custom_call.1} parent=11 // pred_fallthru
          _
        // Predicated region
        $region21: #{tpu_custom_call.1} parent=11 // pred_check
          %p342 = pneg %p132
        $region22: #{tpu_custom_call.1} parent=11 // pred_check_branch
          %344 = sbr.rel (%p342) target = $region24
        $region23: #{tpu_custom_call.1} parent=11 // pred_region
          %s346 = ssub.s32 256, 256
          %347 = vsyncadd [#allocation6], %s346
          %s348 = sshll.u32 [#allocation5], 4
          %s349 = int_to_ptr.vmem [resolvable:$true] %s348
          %354 = dma.hbm_to_vmem [thread:$0]  %s3, 256, %s349, [#allocation6], 64, 64, 4
        $region24: #{tpu_custom_call.1} parent=11 // pred_fallthru
          _
        // Predicated region
        $region25: #{tpu_custom_call.1} parent=11 // pred_check
          %p355 = pneg %p153
        $region26: #{tpu_custom_call.1} parent=11 // pred_check_branch
          %357 = sbr.rel (%p355) target = $region28
        $region27: #{tpu_custom_call.1} parent=11 // pred_region
          _
        $region28: #{tpu_custom_call.1} parent=11 // pred_fallthru
          _
        // Predicated region
        $region29: #{tpu_custom_call.1} parent=11 // pred_check
          %p358 = pneg %p174
        $region30: #{tpu_custom_call.1} parent=11 // pred_check_branch
          %360 = sbr.rel (%p358) target = $region32
        $region31: #{tpu_custom_call.1} parent=11 // pred_region
          %s362 = ssub.s32 256, 256
          %363 = vsyncadd [#allocation6], %s362
          %s364 = sshll.u32 [#allocation7], 4
          %s365 = int_to_ptr.vmem [resolvable:$true] %s364
          %370 = dma.hbm_to_vmem [thread:$0]  %s5, 256, %s365, [#allocation6], 64, 64, 4
        $region32: #{tpu_custom_call.1} parent=11 // pred_fallthru
          _
        // Predicated region
        $region33: #{tpu_custom_call.1} parent=11 // pred_check
          %p371 = pneg %p195
        $region34: #{tpu_custom_call.1} parent=11 // pred_check_branch
          %373 = sbr.rel (%p371) target = $region36
        $region35: #{tpu_custom_call.1} parent=11 // pred_region
          _
        $region36: #{tpu_custom_call.1} parent=11 // pred_fallthru
          _
        // Predicated region
        $region37: #{tpu_custom_call.1} parent=11 // pred_check
          %p374 = pneg %p216
        $region38: #{tpu_custom_call.1} parent=11 // pred_check_branch
          %376 = sbr.rel (%p374) target = $region40
        $region39: #{tpu_custom_call.1} parent=11 // pred_region
          %s378 = ssub.s32 256, 256
          %379 = vsyncadd [#allocation9], %s378
          %s380 = sshll.u32 [#allocation8], 4
          %s381 = int_to_ptr.vmem [resolvable:$true] %s380
          %386 = dma.hbm_to_vmem [thread:$0]  %s7, 256, %s381, [#allocation9], 64, 64, 4
        $region40: #{tpu_custom_call.1} parent=11 // pred_fallthru
          _
        // Predicated region
        $region41: #{tpu_custom_call.1} parent=11 // pred_check
          %p387 = pneg %p237
        $region42: #{tpu_custom_call.1} parent=11 // pred_check_branch
          %389 = sbr.rel (%p387) target = $region44
        $region43: #{tpu_custom_call.1} parent=11 // pred_region
          _
        $region44: #{tpu_custom_call.1} parent=11 // pred_fallthru
          _
      $region12: #{tpu_custom_call.1} parent=5 // pred_fallthru
        _
      %p390 = scmp.lt.s32.totalorder %s29, 2
      // Predicated region
      $region45: #{tpu_custom_call.1} parent=5 // pred_check
        %p391 = pneg %p390
      $region46: #{tpu_custom_call.1} parent=5 // pred_check_branch
        %393 = sbr.rel (%p391) target = $region48
      $region47: #{tpu_custom_call.1} parent=5 // pred_region
        // Predicated region
        $region49: #{tpu_custom_call.1} parent=47 // pred_check
          %p394 = pneg %p63
        $region50: #{tpu_custom_call.1} parent=47 // pred_check_branch
          %396 = sbr.rel (%p394) target = $region52
        $region51: #{tpu_custom_call.1} parent=47 // pred_region
          %s397 = sand.u32 %s53, 1
          %s398 = scalar_lea.sflag [#allocation3], %s397
          %s399 = sand.u32 %s53, 1
          %s400 = smul.addr %s399, 8
          %s401 = scalar_lea.vmem [#allocation2], %s400
          %s403 = ssub.s32 128, 128
          %404 = vsyncadd %s398, %s403
          %s405 = sadd.s32 %s37, %s36
          %s406 = smul.addr %s405, 128
          %s407 = scalar_lea.hbm %s0, %s406
          %s409 = sshll.u32 %s401, 4
          %s410 = int_to_ptr.vmem [resolvable:$true] %s409
          %412 = dma.hbm_to_vmem [thread:$0]  %s407, 128, %s410, %s398
        $region52: #{tpu_custom_call.1} parent=47 // pred_fallthru
          _
      $region48: #{tpu_custom_call.1} parent=5 // pred_fallthru
        _
      %p413 = scmp.le.s32.totalorder 1, %s29
      %p414 = scmp.lt.s32.totalorder %s29, 3
      %p415 = pnand %p413, %p414
      %p416 = pneg %p415
      // Predicated region
      $region53: #{tpu_custom_call.1} parent=5 // pred_check
        _
      $region54: #{tpu_custom_call.1} parent=5 // pred_check_branch
        %418 = sbr.rel (%p415) target = $region56
      $region55: #{tpu_custom_call.1} parent=5 // pred_region
        %s419 = ssub.s32 %s29, 1
        %s420 = sand.u32 %s56, 1
        %s421 = scalar_lea.sflag [#allocation3], %s420
        %s422 = sand.u32 %s56, 1
        %s423 = smul.addr %s422, 8
        %s424 = scalar_lea.vmem [#allocation2], %s423
        // Predicated region
        $region57: #{tpu_custom_call.1} parent=55 // pred_check
          %p425 = pneg %p69
        $region58: #{tpu_custom_call.1} parent=55 // pred_check_branch
          %427 = sbr.rel (%p425) target = $region60
        $region59: #{tpu_custom_call.1} parent=55 // pred_region
          %428 = dma.done %s421, 128
        $region60: #{tpu_custom_call.1} parent=55 // pred_fallthru
          _
        // Predicated region
        $region61: #{tpu_custom_call.1} parent=55 // pred_check
          %p429 = pneg %p132
        $region62: #{tpu_custom_call.1} parent=55 // pred_check_branch
          %431 = sbr.rel (%p429) target = $region64
        $region63: #{tpu_custom_call.1} parent=55 // pred_region
          %432 = dma.done [#allocation6], 256
        $region64: #{tpu_custom_call.1} parent=55 // pred_fallthru
          _
        // Predicated region
        $region65: #{tpu_custom_call.1} parent=55 // pred_check
          %p433 = pneg %p174
        $region66: #{tpu_custom_call.1} parent=55 // pred_check_branch
          %435 = sbr.rel (%p433) target = $region68
        $region67: #{tpu_custom_call.1} parent=55 // pred_region
          %436 = dma.done [#allocation6], 256
        $region68: #{tpu_custom_call.1} parent=55 // pred_fallthru
          _
        // Predicated region
        $region69: #{tpu_custom_call.1} parent=55 // pred_check
          %p437 = pneg %p216
        $region70: #{tpu_custom_call.1} parent=55 // pred_check_branch
          %439 = sbr.rel (%p437) target = $region72
        $region71: #{tpu_custom_call.1} parent=55 // pred_region
          %440 = dma.done [#allocation9], 256
        $region72: #{tpu_custom_call.1} parent=55 // pred_fallthru
          _
        %s441 = sand.u32 %s56, 1
        %s442 = scalar_lea.sflag [#allocation3], %s441
        %s443 = sand.u32 %s56, 1
        %s444 = smul.addr %s443, 8
        %s445 = scalar_lea.vmem [#allocation2], %s444
        %p446 = pneg %p69
        %p447 = pneg %p66
        %p448 = pneg %p90
        %p449 = pneg %p87
        %p450 = pneg %p111
        %p451 = pneg %p108
        %p452 = pneg %p132
        %p453 = pneg %p129
        %p454 = pneg %p153
        %p455 = pneg %p150
        %p456 = pneg %p174
        %p457 = pneg %p171
        %p458 = pneg %p195
        %p459 = pneg %p192
        %p460 = pneg %p216
        %p461 = pneg %p213
        %p462 = pneg %p237
        %p463 = pneg %p234
        %p464 = pneg %p265
        %p465 = pneg %p262
        %s466 = sand.u32 %s252, 1
        %s467 = scalar_lea.sflag [#allocation4], %s466
        %s468 = sand.u32 %s252, 1
        %s469 = smul.addr %s468, 16
        %s470 = scalar_lea.vmem [#allocation10], %s469
        %p471 = pneg %p293
        %p472 = pneg %p290
        %s473 = sand.u32 %s34, 1
        %s474 = scalar_lea.sflag [#allocation12], %s473
        %s475 = sand.u32 %s280, 1
        %s476 = smul.addr %s475, 16
        %s477 = scalar_lea.vmem [#allocation11], %s476
        %p478 = pneg %p321
        %p479 = pneg %p318
        %s480 = sand.u32 %s34, 1
        %s481 = scalar_lea.sflag [#allocation12], %s480
        %s482 = sand.u32 %s308, 1
        %s483 = smul.addr %s482, 16
        %s484 = scalar_lea.vmem [#allocation13], %s483
        %v486 = vld [vmem:[%s424] sm:$0xff]
        %vm487 = vcmask 261120
        %v488 = vsel %vm487, %v486, 0.0
        %489 = vadd.xlane.f32.xlu0 %v488
        %v490 = vpop.xlane.xlu0 %489
        %v491 = vrcp.pop 32.0
        %v492 = vmul.f32 %v490, %v491
        %v493 = vsub.f32 %v486, %v492
        %v494 = vmul.f32 %v493, %v493
        %v495 = vsel %vm487, %v494, 0.0
        %496 = vadd.xlane.f32.xlu0 %v495
        %v497 = vpop.xlane.xlu0 %496
        %v498 = vmul.f32 %v497, %v491
        %v499 = vadd.f32 %v498, 1e-05
        %v500 = vrsqrt.pop %v499
        %v501 = vmul.f32 %v493, %v500
        %v502 = vld [vmem:[%s1] sm:$0x1]
        %v504 = vlaneseq
        %v505 = vshrl.u32 %v504, 7
        %v506 = vsub.s32 0, %v505
        %v507 = vrot.slane %v502, %v506
        %v509 = vmul.f32 %v501, %v507
        %v510 = vld [vmem:[%s2] sm:$0x1]
        %v512 = vlaneseq
        %v513 = vshrl.u32 %v512, 7
        %v514 = vsub.s32 0, %v513
        %v515 = vrot.slane %v510, %v514
        %v517 = vadd.f32 %v509, %v515
        %v518 = vpack.c.bf16 %v517, %v517
        %v519 = vld [vmem:[#allocation5] sm:$0xf]
        %v520 = vld [vmem:[#allocation5 + $0x4] sm:$0xf]
        %v521 = vld [vmem:[#allocation5 + $0x8] sm:$0xf]
        %v522 = vld [vmem:[#allocation5 + $0xc] sm:$0xf]
        %v523 = vld [vmem:[%s4] sm:$0x1]
        %v525 = vlaneseq
        %v526 = vshrl.u32 %v525, 7
        %v527 = vsub.s32 0, %v526
        %v528 = vrot.slane %v523, %v527
        %v534 = vunpack.c.l.b16 %v519
        %v535 = vunpack.c.l.b16 %v520
        %v536 = vunpack.c.l.b16 %v521
        %v537 = vunpack.c.l.b16 %v522
        %v538 = vpack.c.b16 %v535, %v534
        %v539 = vpack.c.b16 %v537, %v536
        %v543 = vsel %vm487, %v518, 0
        %545 = vmatprep.subr.bf16.mxu0 0
        %546 = vmatpush1.bf16.msra.mxu0 0
        %547 = vmatprep.subr.bf16.mxu0 0
        %548 = vmatpush1.bf16.msra.mxu0 0
        %549 = vmatprep.subr.bf16.mxu0 0
        %550 = vmatpush1.bf16.msra.mxu0 0
        %551 = vmatprep.subr.bf16.mxu0 0
        %552 = vmatpush1.bf16.msra.mxu0 0
        %553 = vmatprep.subr.bf16.mxu0 0
        %554 = vmatpush1.bf16.msra.mxu0 0
        %555 = vmatprep.subr.bf16.mxu0 0
        %556 = vmatpush1.bf16.msra.mxu0 0
        %557 = vmatprep.subr.bf16.mxu0 0
        %558 = vmatpush1.bf16.msra.mxu0 %v539
        %559 = vmatprep.subr.bf16.mxu0 0
        %560 = vmatpush1.bf16.msra.mxu0 %v538
        %561 = vmatprep.subr.bf16.mxu0 0
        %562 = vmatpush2.bf16.msra.mxu0 0
        %563 = vmatprep.subr.bf16.mxu0 0
        %564 = vmatpush2.bf16.msra.mxu0 0
        %565 = vmatprep.subr.bf16.mxu0 0
        %566 = vmatpush2.bf16.msra.mxu0 0
        %567 = vmatprep.subr.bf16.mxu0 0
        %568 = vmatpush2.bf16.msra.mxu0 0
        %569 = vmatprep.subr.bf16.mxu0 0
        %570 = vmatpush2.bf16.msra.mxu0 0
        %571 = vmatprep.subr.bf16.mxu0 0
        %572 = vmatpush2.bf16.msra.mxu0 0
        %573 = vmatprep.subr.bf16.mxu0 0
        %574 = vmatpush2.bf16.msra.mxu0 0
        %575 = vmatprep.subr.bf16.mxu0 0
        %576 = vmatpush2.bf16.msra.mxu0 0
        %577 = vmatprep.mubr.bf16.mxu0 0
        %578 = vmatmul.mubr.bf16.gmra.mxu0 %v543
        %v579 = vpop.f32.mrf.mxu0
        %v580 = vadd.f32 %v528, %v579
        %v581 = vpop.f32.mrf.mxu0
        %v582 = vpop.f32.mrf.mxu0
        %v583 = vpop.f32.mrf.mxu0
        %584 = vdwg.mxu0
        %v585 = vld [vmem:[#allocation7] sm:$0xf]
        %v586 = vld [vmem:[#allocation7 + $0x4] sm:$0xf]
        %v587 = vld [vmem:[#allocation7 + $0x8] sm:$0xf]
        %v588 = vld [vmem:[#allocation7 + $0xc] sm:$0xf]
        %v589 = vld [vmem:[%s6] sm:$0x1]
        %v591 = vlaneseq
        %v592 = vshrl.u32 %v591, 7
        %v593 = vsub.s32 0, %v592
        %v594 = vrot.slane %v589, %v593
        %v600 = vunpack.c.l.b16 %v585
        %v601 = vunpack.c.l.b16 %v586
        %v602 = vunpack.c.l.b16 %v587
        %v603 = vunpack.c.l.b16 %v588
        %v604 = vpack.c.b16 %v601, %v600
        %v605 = vpack.c.b16 %v603, %v602
        %608 = vmatprep.subr.bf16.mxu0 0
        %609 = vmatpush1.bf16.msra.mxu0 0
        %610 = vmatprep.subr.bf16.mxu0 0
        %611 = vmatpush1.bf16.msra.mxu0 0
        %612 = vmatprep.subr.bf16.mxu0 0
        %613 = vmatpush1.bf16.msra.mxu0 0
        %614 = vmatprep.subr.bf16.mxu0 0
        %615 = vmatpush1.bf16.msra.mxu0 0
        %616 = vmatprep.subr.bf16.mxu0 0
        %617 = vmatpush1.bf16.msra.mxu0 0
        %618 = vmatprep.subr.bf16.mxu0 0
        %619 = vmatpush1.bf16.msra.mxu0 0
        %620 = vmatprep.subr.bf16.mxu0 0
        %621 = vmatpush1.bf16.msra.mxu0 %v605
        %622 = vmatprep.subr.bf16.mxu0 0
        %623 = vmatpush1.bf16.msra.mxu0 %v604
        %624 = vmatprep.subr.bf16.mxu0 0
        %625 = vmatpush2.bf16.msra.mxu0 0
        %626 = vmatprep.subr.bf16.mxu0 0
        %627 = vmatpush2.bf16.msra.mxu0 0
        %628 = vmatprep.subr.bf16.mxu0 0
        %629 = vmatpush2.bf16.msra.mxu0 0
        %630 = vmatprep.subr.bf16.mxu0 0
        %631 = vmatpush2.bf16.msra.mxu0 0
        %632 = vmatprep.subr.bf16.mxu0 0
        %633 = vmatpush2.bf16.msra.mxu0 0
        %634 = vmatprep.subr.bf16.mxu0 0
        %635 = vmatpush2.bf16.msra.mxu0 0
        %636 = vmatprep.subr.bf16.mxu0 0
        %637 = vmatpush2.bf16.msra.mxu0 0
        %638 = vmatprep.subr.bf16.mxu0 0
        %639 = vmatpush2.bf16.msra.mxu0 0
        %640 = vmatprep.mubr.bf16.mxu0 0
        %641 = vmatmul.mubr.bf16.gmra.mxu0 %v543
        %v642 = vpop.f32.mrf.mxu0
        %v643 = vadd.f32 %v594, %v642
        %v644 = vpop.f32.mrf.mxu0
        %v645 = vpop.f32.mrf.mxu0
        %v646 = vpop.f32.mrf.mxu0
        %647 = vdwg.mxu0
        %v648 = vld [vmem:[#allocation8] sm:$0xf]
        %v649 = vld [vmem:[#allocation8 + $0x4] sm:$0xf]
        %v650 = vld [vmem:[#allocation8 + $0x8] sm:$0xf]
        %v651 = vld [vmem:[#allocation8 + $0xc] sm:$0xf]
        %v652 = vld [vmem:[%s8] sm:$0x1]
        %v654 = vlaneseq
        %v655 = vshrl.u32 %v654, 7
        %v656 = vsub.s32 0, %v655
        %v657 = vrot.slane %v652, %v656
        %v663 = vunpack.c.l.b16 %v648
        %v664 = vunpack.c.l.b16 %v649
        %v665 = vunpack.c.l.b16 %v650
        %v666 = vunpack.c.l.b16 %v651
        %v667 = vpack.c.b16 %v664, %v663
        %v668 = vpack.c.b16 %v666, %v665
        %671 = vmatprep.subr.bf16.mxu0 0
        %672 = vmatpush1.bf16.msra.mxu0 0
        %673 = vmatprep.subr.bf16.mxu0 0
        %674 = vmatpush1.bf16.msra.mxu0 0
        %675 = vmatprep.subr.bf16.mxu0 0
        %676 = vmatpush1.bf16.msra.mxu0 0
        %677 = vmatprep.subr.bf16.mxu0 0
        %678 = vmatpush1.bf16.msra.mxu0 0
        %679 = vmatprep.subr.bf16.mxu0 0
        %680 = vmatpush1.bf16.msra.mxu0 0
        %681 = vmatprep.subr.bf16.mxu0 0
        %682 = vmatpush1.bf16.msra.mxu0 0
        %683 = vmatprep.subr.bf16.mxu0 0
        %684 = vmatpush1.bf16.msra.mxu0 %v668
        %685 = vmatprep.subr.bf16.mxu0 0
        %686 = vmatpush1.bf16.msra.mxu0 %v667
        %687 = vmatprep.subr.bf16.mxu0 0
        %688 = vmatpush2.bf16.msra.mxu0 0
        %689 = vmatprep.subr.bf16.mxu0 0
        %690 = vmatpush2.bf16.msra.mxu0 0
        %691 = vmatprep.subr.bf16.mxu0 0
        %692 = vmatpush2.bf16.msra.mxu0 0
        %693 = vmatprep.subr.bf16.mxu0 0
        %694 = vmatpush2.bf16.msra.mxu0 0
        %695 = vmatprep.subr.bf16.mxu0 0
        %696 = vmatpush2.bf16.msra.mxu0 0
        %697 = vmatprep.subr.bf16.mxu0 0
        %698 = vmatpush2.bf16.msra.mxu0 0
        %699 = vmatprep.subr.bf16.mxu0 0
        %700 = vmatpush2.bf16.msra.mxu0 0
        %701 = vmatprep.subr.bf16.mxu0 0
        %702 = vmatpush2.bf16.msra.mxu0 0
        %703 = vmatprep.mubr.bf16.mxu0 0
        %704 = vmatmul.mubr.bf16.gmra.mxu0 %v543
        %v705 = vpop.f32.mrf.mxu0
        %v706 = vadd.f32 %v657, %v705
        %v707 = vpop.f32.mrf.mxu0
        %v708 = vpop.f32.mrf.mxu0
        %v709 = vpop.f32.mrf.mxu0
        %710 = vdwg.mxu0
        %v711 = vmul.f32 %v580, 0.35355338
        %713 = vrot.lane.b32.xlu0 %v711, 120
        %v714 = vpop.permute.xlu0 %713
        %716 = vrot.lane.b32.xlu0 %v711, 112
        %v717 = vpop.permute.xlu0 %716
        %719 = vrot.lane.b32.xlu0 %v711, 104
        %v720 = vpop.permute.xlu0 %719
        %v722 = vpack.c.bf16 %v711, %v711
        %v723 = vpack.c.bf16 %v714, %v714
        %v724 = vpack.c.bf16 %v717, %v717
        %v725 = vpack.c.bf16 %v720, %v720
        %vm726 = vcmask 60416
        %727 = vst.msk [vmem:[%s470] sm:$0xf] %vm726, %v722
        %728 = vst.msk [vmem:[%s470 + $0x4] sm:$0xf] %vm726, %v723
        %729 = vst.msk [vmem:[%s470 + $0x8] sm:$0xf] %vm726, %v724
        %730 = vst.msk [vmem:[%s470 + $0xc] sm:$0xf] %vm726, %v725
        %732 = vrot.lane.b32.xlu0 %v643, 120
        %v733 = vpop.permute.xlu0 %732
        %735 = vrot.lane.b32.xlu0 %v643, 112
        %v736 = vpop.permute.xlu0 %735
        %738 = vrot.lane.b32.xlu0 %v643, 104
        %v739 = vpop.permute.xlu0 %738
        %v741 = vpack.c.bf16 %v643, %v643
        %v742 = vpack.c.bf16 %v733, %v733
        %v743 = vpack.c.bf16 %v736, %v736
        %v744 = vpack.c.bf16 %v739, %v739
        %745 = vst.msk [vmem:[%s477] sm:$0xf] %vm726, %v741
        %746 = vst.msk [vmem:[%s477 + $0x4] sm:$0xf] %vm726, %v742
        %747 = vst.msk [vmem:[%s477 + $0x8] sm:$0xf] %vm726, %v743
        %748 = vst.msk [vmem:[%s477 + $0xc] sm:$0xf] %vm726, %v744
        %750 = vrot.lane.b32.xlu0 %v706, 120
        %v751 = vpop.permute.xlu0 %750
        %753 = vrot.lane.b32.xlu0 %v706, 112
        %v754 = vpop.permute.xlu0 %753
        %756 = vrot.lane.b32.xlu0 %v706, 104
        %v757 = vpop.permute.xlu0 %756
        %v759 = vpack.c.bf16 %v706, %v706
        %v760 = vpack.c.bf16 %v751, %v751
        %v761 = vpack.c.bf16 %v754, %v754
        %v762 = vpack.c.bf16 %v757, %v757
        %763 = vst.msk [vmem:[%s484] sm:$0xf] %vm726, %v759
        %764 = vst.msk [vmem:[%s484 + $0x4] sm:$0xf] %vm726, %v760
        %765 = vst.msk [vmem:[%s484 + $0x8] sm:$0xf] %vm726, %v761
        %766 = vst.msk [vmem:[%s484 + $0xc] sm:$0xf] %vm726, %v762
        %s767 = sand.u32 %s252, 1
        %s768 = scalar_lea.sflag [#allocation4], %s767
        %s769 = sand.u32 %s252, 1
        %s770 = smul.addr %s769, 16
        %s771 = scalar_lea.vmem [#allocation10], %s770
        %s772 = sand.u32 %s34, 1
        %s773 = scalar_lea.sflag [#allocation12], %s772
        %s774 = sand.u32 %s280, 1
        %s775 = smul.addr %s774, 16
        %s776 = scalar_lea.vmem [#allocation11], %s775
        %s777 = sand.u32 %s34, 1
        %s778 = scalar_lea.sflag [#allocation12], %s777
        %s779 = sand.u32 %s308, 1
        %s780 = smul.addr %s779, 16
        %s781 = scalar_lea.vmem [#allocation13], %s780
        // Predicated region
        $region73: #{tpu_custom_call.1} parent=55 // pred_check
          %p782 = pneg %p262
        $region74: #{tpu_custom_call.1} parent=55 // pred_check_branch
          %784 = sbr.rel (%p782) target = $region76
        $region75: #{tpu_custom_call.1} parent=55 // pred_region
          %s786 = ssub.s32 256, 256
          %787 = vsyncadd %s768, %s786
          %s788 = smul.addr %s38, 4
          %s789 = sadd.s32 %s39, %s788
          %s790 = smul.addr %s789, 64
          %s791 = scalar_lea.hbm %s9, %s790
          %s792 = sshll.u32 %s771, 4
          %s793 = int_to_ptr.vmem [resolvable:$true] %s792
          %798 = dma.vmem_to_hbm [thread:$0]  %s793, 256, %s791, %s768, 64, 64, 4
        $region76: #{tpu_custom_call.1} parent=55 // pred_fallthru
          _
        // Predicated region
        $region77: #{tpu_custom_call.1} parent=55 // pred_check
          %p799 = pneg %p290
        $region78: #{tpu_custom_call.1} parent=55 // pred_check_branch
          %801 = sbr.rel (%p799) target = $region80
        $region79: #{tpu_custom_call.1} parent=55 // pred_region
          %s803 = ssub.s32 256, 256
          %804 = vsyncadd %s773, %s803
          %s805 = smul.addr %s38, 4
          %s806 = sadd.s32 %s39, %s805
          %s807 = smul.addr %s806, 64
          %s808 = scalar_lea.hbm %s10, %s807
          %s809 = sshll.u32 %s776, 4
          %s810 = int_to_ptr.vmem [resolvable:$true] %s809
          %815 = dma.vmem_to_hbm [thread:$0]  %s810, 256, %s808, %s773, 64, 64, 4
        $region80: #{tpu_custom_call.1} parent=55 // pred_fallthru
          _
        // Predicated region
        $region81: #{tpu_custom_call.1} parent=55 // pred_check
          %p816 = pneg %p318
        $region82: #{tpu_custom_call.1} parent=55 // pred_check_branch
          %818 = sbr.rel (%p816) target = $region84
        $region83: #{tpu_custom_call.1} parent=55 // pred_region
          %s820 = ssub.s32 256, 256
          %821 = vsyncadd %s778, %s820
          %s822 = smul.addr %s38, 4
          %s823 = sadd.s32 %s39, %s822
          %s824 = smul.addr %s823, 64
          %s825 = scalar_lea.hbm %s11, %s824
          %s826 = sshll.u32 %s781, 4
          %s827 = int_to_ptr.vmem [resolvable:$true] %s826
          %832 = dma.vmem_to_hbm [thread:$0]  %s827, 256, %s825, %s778, 64, 64, 4
        $region84: #{tpu_custom_call.1} parent=55 // pred_fallthru
          _
      $region56: #{tpu_custom_call.1} parent=5 // pred_fallthru
        _
      %p833 = scmp.le.s32.totalorder 2, %s29
      // Predicated region
      $region85: #{tpu_custom_call.1} parent=5 // pred_check
        %p834 = pneg %p833
      $region86: #{tpu_custom_call.1} parent=5 // pred_check_branch
        %836 = sbr.rel (%p834) target = $region88
      $region87: #{tpu_custom_call.1} parent=5 // pred_region
        %s837 = ssub.s32 %s29, 2
        // Predicated region
        $region89: #{tpu_custom_call.1} parent=87 // pred_check
          %p838 = pneg %p268
        $region90: #{tpu_custom_call.1} parent=87 // pred_check_branch
          %840 = sbr.rel (%p838) target = $region92
        $region91: #{tpu_custom_call.1} parent=87 // pred_region
          %s841 = sand.u32 %s253, 1
          %s842 = scalar_lea.sflag [#allocation4], %s841
          %s843 = sand.u32 %s253, 1
          %s844 = smul.addr %s843, 16
          %s845 = scalar_lea.vmem [#allocation10], %s844
          %846 = dma.done %s842, 256
        $region92: #{tpu_custom_call.1} parent=87 // pred_fallthru
          _
        // Predicated region
        $region93: #{tpu_custom_call.1} parent=87 // pred_check
          %p847 = pneg %p296
        $region94: #{tpu_custom_call.1} parent=87 // pred_check_branch
          %849 = sbr.rel (%p847) target = $region96
        $region95: #{tpu_custom_call.1} parent=87 // pred_region
          %s850 = sand.u32 %s35, 1
          %s851 = scalar_lea.sflag [#allocation12], %s850
          %s852 = sand.u32 %s281, 1
          %s853 = smul.addr %s852, 16
          %s854 = scalar_lea.vmem [#allocation11], %s853
          %855 = dma.done %s851, 256
        $region96: #{tpu_custom_call.1} parent=87 // pred_fallthru
          _
        // Predicated region
        $region97: #{tpu_custom_call.1} parent=87 // pred_check
          %p856 = pneg %p324
        $region98: #{tpu_custom_call.1} parent=87 // pred_check_branch
          %858 = sbr.rel (%p856) target = $region100
        $region99: #{tpu_custom_call.1} parent=87 // pred_region
          %s859 = sand.u32 %s35, 1
          %s860 = scalar_lea.sflag [#allocation12], %s859
          %s861 = sand.u32 %s309, 1
          %s862 = smul.addr %s861, 16
          %s863 = scalar_lea.vmem [#allocation13], %s862
          %864 = dma.done %s860, 256
        $region100: #{tpu_custom_call.1} parent=87 // pred_fallthru
          _
      $region88: #{tpu_custom_call.1} parent=5 // pred_fallthru
        _
    $region6: #{tpu_custom_call.1} parent=1 // loop_footer
      %s33 = sadd.s32 1, %s29
    $region7: #{tpu_custom_call.1} parent=1 // loop_footer_branch
      %28 = sbr.rel target = $region3
    $region8: #{tpu_custom_call.1} parent=1 // loop_exit
      _
    %865 = vsyncpa [#allocation3], 1
    %s866 = scalar_lea.sflag [#allocation3], 1
    %867 = vsyncpa %s866, 1
    %868 = vsyncpa [#allocation6], 1
    %869 = vsyncpa [#allocation9], 1
    %870 = vsyncpa [#allocation4], 1
    %s871 = scalar_lea.sflag [#allocation4], 1
    %872 = vsyncpa %s871, 1
    %873 = vsyncpa [#allocation12], 1
    %s874 = scalar_lea.sflag [#allocation12], 1
    %875 = vsyncpa %s874, 1

</llo_original>
